<compile_context>
chip_gen: v7x
topology: tpu7x:2x2x1
jax: 0.10.0
libtpu: 0.0.40
codegen_flags: <defaults>
</compile_context>

<pallas_src>
import jax
import jax.numpy as jnp
from jax import lax
from jax.experimental import pallas as pl
from jax.experimental.pallas import tpu as pltpu

NEG_SLOPE = 0.2
BN_EPS = 1e-5
TILE_OUT = 256  # multiple of 256: full MXU N-dim on v6e/v7x, VMEM-safe on v7x.


def _round_up(x, m):
    return ((x + m - 1) // m) * m


def nnlayer_kernel(x_ref, wt_ref, gb_ref, o_ref):
    # x_ref:  (N, IN)        VMEM, resident across the OUT grid
    # wt_ref: (IN, TILE_OUT) VMEM  (pre-transposed, lane-padded linear weight tile)
    # gb_ref: (2, TILE_OUT)  VMEM  (row 0 = gamma, row 1 = beta)
    # o_ref:  (N, TILE_OUT)  VMEM  block of the (N, OUT) output
    #
    # Linear (no bias: exactly cancelled by training-mode BN mean subtraction).
    y = jnp.dot(x_ref[...], wt_ref[...], preferred_element_type=jnp.float32)

    # BatchNorm1d (training mode): per-feature batch mean / biased variance.
    # NOTE: x is resident (whole batch in this block), so y.shape[0] == true N.
    # If a batch-axis grid is ever added, the divisor/sums below must be fixed.
    n = y.shape[0]
    inv_n = 1.0 / n
    ones_row = jnp.ones((1, n), jnp.float32)

    # Column sums on the MXU (off the VPU critical path); two-pass variance for
    # numerical stability.
    mean = jnp.dot(ones_row, y, preferred_element_type=jnp.float32) * inv_n   # (1, T)
    diff = y - mean
    var = jnp.dot(ones_row, diff * diff,
                  preferred_element_type=jnp.float32) * inv_n                 # (1, T)

    # Fold normalization + affine into one per-feature scale on the (1, T) row.
    gamma = gb_ref[0:1, :]
    beta = gb_ref[1:2, :]
    scale = gamma * lax.rsqrt(var + BN_EPS)        # EUP rsqrt, (1, T)
    y_bn = diff * scale + beta                     # 2 elementwise ops per element

    # LeakyReLU (negative_slope < 1 => max form is exact).
    out = jnp.maximum(y_bn, NEG_SLOPE * y_bn)
    o_ref[...] = out.astype(o_ref.dtype)


def nnlayer_prepare_params(weight, gamma, beta, *, tile_out=TILE_OUT,
                           matmul_dtype=jnp.bfloat16):
    """One-time parameter transform (hoisted out of the forward path).

    weight: (OUT, IN); gamma/beta: (OUT,).
    Returns (wt, gb): wt (IN, OUT_P) in matmul dtype, gb (2, OUT_P) f32, with
    OUT_P = OUT rounded up to a multiple of tile_out (padding = zeros, which
    makes padded columns exactly 0 and finite inside the kernel).
    """
    out_size, _ = weight.shape
    out_p = _round_up(out_size, tile_out)
    pad = out_p - out_size

    wt = weight.T.astype(matmul_dtype)                       # (IN, OUT)
    gamma = gamma.astype(jnp.float32)
    beta = beta.astype(jnp.float32)
    if pad:
        wt = jnp.pad(wt, ((0, 0), (0, pad)))
        gamma = jnp.pad(gamma, (0, pad))
        beta = jnp.pad(beta, (0, pad))
    gb = jnp.stack([gamma, beta], axis=0)                    # (2, OUT_P), one DMA
    return wt, gb


def nnlayer_forward(x, wt, gb, out_size, *, tile_out=TILE_OUT, out_dtype=None):
    """x: (N, IN); wt: (IN, OUT_P) pre-transposed/padded; gb: (2, OUT_P).

    The Linear bias is intentionally absent: under training-mode BatchNorm the
    bias is mathematically a no-op (cancelled by the batch-mean subtraction).
    """
    n, in_size = x.shape
    in_w, out_p = wt.shape
    assert in_w == in_size, "weight IN dim mismatch"
    assert out_p % tile_out == 0, "padded OUT must be a multiple of tile_out"
    if out_dtype is None:
        out_dtype = x.dtype

    grid = (out_p // tile_out,)

    out = pl.pallas_call(
        nnlayer_kernel,
        out_shape=jax.ShapeDtypeStruct((n, out_size), out_dtype),
        grid_spec=pltpu.PrefetchScalarGridSpec(
            num_scalar_prefetch=0,
            grid=grid,
            in_specs=[
                pl.BlockSpec((n, in_size), lambda j: (0, 0)),       # x resident
                pl.BlockSpec((in_size, tile_out), lambda j: (0, j)),  # weight tile
                pl.BlockSpec((2, tile_out), lambda j: (0, j)),        # gamma/beta tile
            ],
            out_specs=pl.BlockSpec((n, tile_out), lambda j: (0, j)),
        ),
        compiler_params=pltpu.CompilerParams(
            # OUT tiles are independent -> both v7x TensorCores can take tiles.
            dimension_semantics=("parallel",),
            # Headroom above the 16/32 MiB scoped defaults; still < v7x 64 MiB.
            vmem_limit_bytes=48 * 1024 * 1024,
        ),
    )(x.astype(wt.dtype), wt, gb)
    # TODO(synk): for very large N, add a batch-axis pipeline with merged BN
    # stats (Welford / two-pass over tiles); here x stays resident so the BN
    # divisor and sums are exact.
    return out


def reference_forward(x, weight, bias, gamma, beta):
    y = x @ weight.T + bias
    mean = jnp.mean(y, axis=0, keepdims=True)
    var = jnp.mean((y - mean) ** 2, axis=0, keepdims=True)
    y_hat = (y - mean) / jnp.sqrt(var + BN_EPS)
    y_bn = y_hat * gamma + beta
    return jnp.where(y_bn >= 0, y_bn, NEG_SLOPE * y_bn)


def _make_params(key, in_size, out_size):
    kw, kb, kg, kbe = jax.random.split(key, 4)
    bound = 1.0 / (in_size ** 0.5)
    weight = jax.random.uniform(kw, (out_size, in_size), minval=-bound,
                                maxval=bound, dtype=jnp.float32)
    bias = jax.random.uniform(kb, (out_size,), minval=-bound, maxval=bound,
                              dtype=jnp.float32)
    gamma = jnp.ones((out_size,), jnp.float32) + 0.01 * jax.random.normal(
        kg, (out_size,))
    beta = 0.01 * jax.random.normal(kbe, (out_size,))
    return weight, bias, gamma, beta


if __name__ == "__main__":
    key = jax.random.PRNGKey(0)
    k1, k2, kx1, kx2 = jax.random.split(key, 4)

    # --- Test 1: module demo shape (batch=8, input_size=32, output_size=64) ---
    N, IN, OUT = 8, 32, 64
    x = jax.random.normal(kx1, (N, IN), dtype=jnp.float32)
    weight, bias, gamma, beta = _make_params(k1, IN, OUT)
    ref = reference_forward(x, weight, bias, gamma, beta)

    # bf16 matmul path (default): MXU-native operands, f32 accumulation/BN tail.
    wt_bf16, gb = nnlayer_prepare_params(weight, gamma, beta)       # hoisted, once
    out_bf16 = nnlayer_forward(x, wt_bf16, gb, OUT)
    jax.block_until_ready(out_bf16)
    assert out_bf16.shape == (N, OUT)
    assert jnp.allclose(out_bf16, ref, atol=6e-2, rtol=6e-2), \
        "bf16 path mismatch vs reference"

    # f32 matmul path: tight-tolerance correctness check of the fused kernel.
    wt_f32, gb_f32 = nnlayer_prepare_params(weight, gamma, beta,
                                            matmul_dtype=jnp.float32)
    out_f32 = nnlayer_forward(x, wt_f32, gb_f32, OUT)
    jax.block_until_ready(out_f32)
    assert jnp.allclose(out_f32, ref, atol=1e-4, rtol=1e-4), \
        "f32 path mismatch vs reference"

    # --- Test 2: multi-tile OUT grid (grid=2, exercises the parallel axis) ---
    N2, IN2, OUT2 = 64, 32, 512
    x2 = jax.random.normal(kx2, (N2, IN2), dtype=jnp.float32)
    weight2, bias2, gamma2, beta2 = _make_params(k2, IN2, OUT2)
    ref2 = reference_forward(x2, weight2, bias2, gamma2, beta2)

    wt2, gb2 = nnlayer_prepare_params(weight2, gamma2, beta2,
                                      matmul_dtype=jnp.float32)
    out2 = nnlayer_forward(x2, wt2, gb2, OUT2)
    jax.block_until_ready(out2)
    assert out2.shape == (N2, OUT2)
    assert jnp.allclose(out2, ref2, atol=1e-4, rtol=1e-4), \
        "multi-tile path mismatch vs reference"

    print("KERNEL_OK")
</pallas_src>

<mosaic_0001>
module attributes {stable_mosaic.version = 11 : i64} {
  func.func @nnlayer_kernel(%arg0: i32, %arg1: memref<8x32xbf16, #tpu.memory_space<vmem>>, %arg2: memref<32x256xbf16, #tpu.memory_space<vmem>>, %arg3: memref<2x256xf32, #tpu.memory_space<vmem>>, %arg4: memref<8x256xf32, #tpu.memory_space<vmem>>) attributes {dimension_semantics = [#tpu.dimension_semantics<parallel>], iteration_bounds = array<i64: 1>, scalar_prefetch = 0 : i64, scratch_operands = 0 : i64, tpu.core_type = #tpu.core_type<tc>, window_params = [{pipeline_mode = #tpu.pipeline_mode<synchronous>, transform_indices = @transform_0, window_bounds = array<i64: 8, 32>}, {transform_indices = @transform_1, window_bounds = array<i64: 32, 256>}, {transform_indices = @transform_2, window_bounds = array<i64: 2, 256>}, {transform_indices = @transform_3, window_bounds = array<i64: 8, 256>}]} {
    %c0 = arith.constant 0 : index
    %c0_0 = arith.constant 0 : index
    %0 = vector.load %arg1[%c0, %c0_0] : memref<8x32xbf16, #tpu.memory_space<vmem>>, vector<8x32xbf16>
    %c0_1 = arith.constant 0 : index
    %c0_2 = arith.constant 0 : index
    %1 = vector.load %arg2[%c0_1, %c0_2] : memref<32x256xbf16, #tpu.memory_space<vmem>>, vector<32x256xbf16>
    %cst = arith.constant dense<0.000000e+00> : vector<8x256xf32>
    %2 = tpu.matmul %0, %1, %cst {dimension_numbers = #tpu.dot_dimension_numbers<[1], [0], [0], [1], [0, 0, 1, 1], [], []>} : vector<8x32xbf16>, vector<32x256xbf16>, vector<8x256xf32> -> vector<8x256xf32>
    %cst_3 = arith.constant 1.000000e+00 : f32
    %3 = vector.broadcast %cst_3 : f32 to vector<1x8xf32>
    %cst_4 = arith.constant dense<0.000000e+00> : vector<1x256xf32>
    %4 = tpu.matmul %3, %2, %cst_4 {dimension_numbers = #tpu.dot_dimension_numbers<[1], [0], [0], [1], [0, 0, 1, 1], [], []>} : vector<1x8xf32>, vector<8x256xf32>, vector<1x256xf32> -> vector<1x256xf32>
    %cst_5 = arith.constant 1.250000e-01 : f32
    %5 = vector.broadcast %cst_5 : f32 to vector<1x256xf32>
    %6 = arith.mulf %4, %5 : vector<1x256xf32>
    %7 = vector.broadcast %6 : vector<1x256xf32> to vector<8x256xf32>
    %8 = arith.subf %2, %7 : vector<8x256xf32>
    %9 = arith.mulf %8, %8 : vector<8x256xf32>
    %cst_6 = arith.constant dense<0.000000e+00> : vector<1x256xf32>
    %10 = tpu.matmul %3, %9, %cst_6 {dimension_numbers = #tpu.dot_dimension_numbers<[1], [0], [0], [1], [0, 0, 1, 1], [], []>} : vector<1x8xf32>, vector<8x256xf32>, vector<1x256xf32> -> vector<1x256xf32>
    %cst_7 = arith.constant 1.250000e-01 : f32
    %11 = vector.broadcast %cst_7 : f32 to vector<1x256xf32>
    %12 = arith.mulf %10, %11 : vector<1x256xf32>
    %c0_8 = arith.constant 0 : index
    %c0_9 = arith.constant 0 : index
    %13 = vector.load %arg3[%c0_8, %c0_9] : memref<2x256xf32, #tpu.memory_space<vmem>>, vector<1x256xf32>
    %c1 = arith.constant 1 : index
    %c0_10 = arith.constant 0 : index
    %14 = vector.load %arg3[%c1, %c0_10] : memref<2x256xf32, #tpu.memory_space<vmem>>, vector<1x256xf32>
    %cst_11 = arith.constant 9.99999974E-6 : f32
    %15 = vector.broadcast %cst_11 : f32 to vector<1x256xf32>
    %16 = arith.addf %12, %15 : vector<1x256xf32>
    %17 = math.rsqrt %16 : vector<1x256xf32>
    %18 = arith.mulf %13, %17 : vector<1x256xf32>
    %19 = vector.broadcast %18 : vector<1x256xf32> to vector<8x256xf32>
    %20 = arith.mulf %8, %19 : vector<8x256xf32>
    %21 = vector.broadcast %14 : vector<1x256xf32> to vector<8x256xf32>
    %22 = arith.addf %20, %21 : vector<8x256xf32>
    %cst_12 = arith.constant 2.000000e-01 : f32
    %23 = vector.broadcast %cst_12 : f32 to vector<8x256xf32>
    %24 = arith.mulf %23, %22 : vector<8x256xf32>
    %25 = arith.maximumf %22, %24 : vector<8x256xf32>
    %c0_13 = arith.constant 0 : index
    %c0_14 = arith.constant 0 : index
    %26 = vector.load %arg4[%c0_13, %c0_14] : memref<8x256xf32, #tpu.memory_space<vmem>>, vector<8x256xf32>
    tpu.vector_store %arg4[%c0_13, %c0_14], %25 {strides = array<i32>} : memref<8x256xf32, #tpu.memory_space<vmem>>, vector<8x256xf32>,
    return
  }
  func.func @transform_0(%arg0: i32) -> (i32, i32) {
    %c0_i32 = arith.constant 0 : i32
    %c0_i32_0 = arith.constant 0 : i32
    %c0_i32_1 = arith.constant 0 : i32
    return %c0_i32, %c0_i32_0 : i32, i32
  }
  func.func @transform_1(%arg0: i32) -> (i32, i32) {
    %c0_i32 = arith.constant 0 : i32
    %c0_i32_0 = arith.constant 0 : i32
    return %c0_i32, %arg0 : i32, i32
  }
  func.func @transform_2(%arg0: i32) -> (i32, i32) {
    %c0_i32 = arith.constant 0 : i32
    %c0_i32_0 = arith.constant 0 : i32
    return %c0_i32, %arg0 : i32, i32
  }
  func.func @transform_3(%arg0: i32) -> (i32, i32) {
    %c0_i32 = arith.constant 0 : i32
    %c0_i32_0 = arith.constant 0 : i32
    return %c0_i32, %arg0 : i32, i32
  }
}

</mosaic_0001>

<llo_original>
// kernel: tpu_custom_call.1
$region0: #{tpu_custom_call.1}
  #allocation0 [shape = 'u32[]', space=smem, size = 0x4, offset = 0x4, fixed_abs, tag = 'smem constant byte address 0x4 - core index']
  #allocation1 [shape = 'u32[144,128]{1,0:T(1,128)}', space=vmem, size = 0x12000, scoped, tag = 'internal scratch']
  %s0 = inlined_call_operand.hbm [shape: bf16[8,32], index: 0, kind: input, shape index: {}]
  %s1 = inlined_call_operand.hbm [shape: bf16[32,256], index: 1, kind: input, shape index: {}]
  %s2 = inlined_call_operand.vmem [shape: f32[2,256], index: 2, kind: input, shape index: {}]
  %s3 = inlined_call_operand.hbm [shape: f32[8,64], index: 3, kind: output, shape index: {}]
  %s4 = sld [smem:[#allocation0]]
  $region30: #{tpu_custom_call.1} parent=0
    _
  %s6 = ssub.s32 1, %s4
  %s7 = scalar_select 0, %s6, %s4
  $region1: #{tpu_custom_call.1} parent=0
    #allocation2 [shape = 'u8[2048]{0}', space=vmem, size = 0x800, scoped, tag = 'input window, operand 0, single buffered']
    #allocation3 [shape = 's32[1]{0}', space=sflag, size = 0x4, scoped, tag = 'scoped memory for tpu_custom_call.1']
    #allocation4 [shape = 's32[1]{0}', space=sflag, size = 0x4, scoped, tag = 'scoped memory for tpu_custom_call.1']
    #allocation5 [shape = 'u8[16384]{0}', space=vmem, size = 0x4000, scoped, tag = 'input window, operand 1, single buffered']
    #allocation6 [shape = 's32[1]{0}', space=sflag, size = 0x4, scoped, tag = 'scoped memory for tpu_custom_call.1']
    #allocation7 [shape = 'u8[8192]{0}', space=vmem, size = 0x2000, scoped, tag = 'output window, operand 0, single buffered']
    %8 = vsyncpa [#allocation3], 0
    %9 = vsyncpa [#allocation6], 0
    %10 = vsyncpa [#allocation4], 0
    // Predicated region
    $region2: #{tpu_custom_call.1} parent=1 // pred_check
      _
    $region3: #{tpu_custom_call.1} parent=1 // pred_check_branch
      %12 = sbr.rel (0) target = $region5
    $region4: #{tpu_custom_call.1} parent=1 // pred_region
      %s14 = ssub.s32 64, 64
      %15 = vsyncadd [#allocation3], %s14
      %s17 = sshll.u32 [#allocation2], 4
      %s18 = int_to_ptr.vmem [resolvable:$true] %s17
      %20 = dma.hbm_to_vmem [thread:$0]  %s0, 64, %s18, [#allocation3]
    $region5: #{tpu_custom_call.1} parent=1 // pred_fallthru
      _
    // Predicated region
    $region6: #{tpu_custom_call.1} parent=1 // pred_check
      _
    $region7: #{tpu_custom_call.1} parent=1 // pred_check_branch
      %22 = sbr.rel (0) target = $region9
    $region8: #{tpu_custom_call.1} parent=1 // pred_region
      %s24 = ssub.s32 512, 512
      %25 = vsyncadd [#allocation6], %s24
      %s26 = sshll.u32 [#allocation5], 4
      %s27 = int_to_ptr.vmem [resolvable:$true] %s26
      %32 = dma.hbm_to_vmem [thread:$0]  %s1, 512, %s27, [#allocation6], 128, 128, 8
    $region9: #{tpu_custom_call.1} parent=1 // pred_fallthru
      _
    // Predicated region
    $region10: #{tpu_custom_call.1} parent=1 // pred_check
      _
    $region11: #{tpu_custom_call.1} parent=1 // pred_check_branch
      %34 = sbr.rel (0) target = $region13
    $region12: #{tpu_custom_call.1} parent=1 // pred_region
      _
    $region13: #{tpu_custom_call.1} parent=1 // pred_fallthru
      _
    // Predicated region
    $region14: #{tpu_custom_call.1} parent=1 // pred_check
      _
    $region15: #{tpu_custom_call.1} parent=1 // pred_check_branch
      %36 = sbr.rel (0) target = $region17
    $region16: #{tpu_custom_call.1} parent=1 // pred_region
      %37 = dma.done [#allocation3], 64
    $region17: #{tpu_custom_call.1} parent=1 // pred_fallthru
      _
    // Predicated region
    $region18: #{tpu_custom_call.1} parent=1 // pred_check
      _
    $region19: #{tpu_custom_call.1} parent=1 // pred_check_branch
      %39 = sbr.rel (0) target = $region21
    $region20: #{tpu_custom_call.1} parent=1 // pred_region
      %40 = dma.done [#allocation6], 512
    $region21: #{tpu_custom_call.1} parent=1 // pred_fallthru
      _
    %v42 = vld [vmem:[#allocation2] sm:$0xf]
    %v43 = vld [vmem:[#allocation5] sm:$0xff]
    %v44 = vld [vmem:[#allocation5 + $0x8] sm:$0xff]
    %v45 = vld [vmem:[#allocation5 + $0x10] sm:$0xff]
    %v46 = vld [vmem:[#allocation5 + $0x18] sm:$0xff]
    %v51 = vunpack.c.l.b16 %v43
    %v52 = vunpack.c.h.b16 %v43
    %v53 = vunpack.c.l.b16 %v44
    %v54 = vunpack.c.h.b16 %v44
    %v55 = vunpack.c.l.b16 %v45
    %v56 = vunpack.c.h.b16 %v45
    %v57 = vunpack.c.l.b16 %v46
    %v58 = vunpack.c.h.b16 %v46
    %v59 = vpack.c.b16 %v53, %v51
    %v60 = vpack.c.b16 %v54, %v52
    %v61 = vpack.c.b16 %v57, %v55
    %v62 = vpack.c.b16 %v58, %v56
    %vm67 = vcmask 261120
    %v69 = vsel %vm67, %v42, 0
    %71 = vmatprep.subr.bf16.mxu0 %v60
    %72 = vmatpush1.bf16.msra.mxu0 %v59
    %73 = vmatprep.subr.bf16.mxu0 %v62
    %74 = vmatpush1.bf16.msra.mxu0 %v61
    %75 = vmatprep.subr.bf16.mxu0 0
    %76 = vmatpush1.bf16.msra.mxu0 0
    %77 = vmatprep.subr.bf16.mxu0 0
    %78 = vmatpush1.bf16.msra.mxu0 0
    %79 = vmatprep.subr.bf16.mxu0 0
    %80 = vmatpush1.bf16.msra.mxu0 0
    %81 = vmatprep.subr.bf16.mxu0 0
    %82 = vmatpush1.bf16.msra.mxu0 0
    %83 = vmatprep.subr.bf16.mxu0 0
    %84 = vmatpush1.bf16.msra.mxu0 0
    %85 = vmatprep.subr.bf16.mxu0 0
    %86 = vmatpush1.bf16.msra.mxu0 0
    %87 = vmatprep.subr.bf16.mxu0 0
    %88 = vmatpush1.bf16.msra.mxu0 0
    %89 = vmatprep.subr.bf16.mxu0 0
    %90 = vmatpush1.bf16.msra.mxu0 0
    %91 = vmatprep.subr.bf16.mxu0 0
    %92 = vmatpush1.bf16.msra.mxu0 0
    %93 = vmatprep.subr.bf16.mxu0 0
    %94 = vmatpush1.bf16.msra.mxu0 0
    %95 = vmatprep.subr.bf16.mxu0 0
    %96 = vmatpush1.bf16.msra.mxu0 0
    %97 = vmatprep.subr.bf16.mxu0 0
    %98 = vmatpush1.bf16.msra.mxu0 0
    %99 = vmatprep.subr.bf16.mxu0 0
    %100 = vmatpush1.bf16.msra.mxu0 0
    %101 = vmatprep.subr.bf16.mxu0 0
    %102 = vmatpush1.bf16.msra.mxu0 0
    %103 = vmatprep.mubr.bf16.mxu0 0
    %104 = vmatmul.mubr.bf16.gmra.mrb[0].mxu0 %v69
    %v105 = vpop.f32.mrb[0].mxu0
    %v106 = vadd.f32 0.0, %v105
    %v107 = vpop.f32.mrb[0].mxu0
    %v108 = vadd.f32 0.0, %v107
    %v109 = vpop.f32.mrb[0].mxu0
    %v110 = vpop.f32.mrb[0].mxu0
    %111 = vdwg.mxu0
    %vm112 = vcmask 64512
    %v114 = vsel %vm112, 1.0, 0
    %116 = vmatprep.subr.mxu0 %v108
    %117 = vmatpush1.msra.mxu0 %v106
    %118 = vmatprep.subr.mxu0 0.0
    %119 = vmatpush1.msra.mxu0 0.0
    %120 = vmatprep.subr.mxu0 0.0
    %121 = vmatpush1.msra.mxu0 0.0
    %122 = vmatprep.subr.mxu0 0.0
    %123 = vmatpush1.msra.mxu0 0.0
    %124 = vmatprep.subr.mxu0 0.0
    %125 = vmatpush1.msra.mxu0 0.0
    %126 = vmatprep.subr.mxu0 0.0
    %127 = vmatpush1.msra.mxu0 0.0
    %128 = vmatprep.subr.mxu0 0.0
    %129 = vmatpush1.msra.mxu0 0.0
    %130 = vmatprep.subr.mxu0 0.0
    %131 = vmatpush1.msra.mxu0 0.0
    %132 = vmatprep.subr.mxu0 0.0
    %133 = vmatpush1.msra.mxu0 0.0
    %134 = vmatprep.subr.mxu0 0.0
    %135 = vmatpush1.msra.mxu0 0.0
    %136 = vmatprep.subr.mxu0 0.0
    %137 = vmatpush1.msra.mxu0 0.0
    %138 = vmatprep.subr.mxu0 0.0
    %139 = vmatpush1.msra.mxu0 0.0
    %140 = vmatprep.subr.mxu0 0.0
    %141 = vmatpush1.msra.mxu0 0.0
    %142 = vmatprep.subr.mxu0 0.0
    %143 = vmatpush1.msra.mxu0 0.0
    %144 = vmatprep.subr.mxu0 0.0
    %145 = vmatpush1.msra.mxu0 0.0
    %146 = vmatprep.subr.mxu0 0.0
    %147 = vmatpush1.msra.mxu0 0.0
    %148 = vmatprep.subr.mxu0 0.0
    %149 = vmatpush1.msra.mxu0 0.0
    %150 = vmatprep.subr.mxu0 0.0
    %151 = vmatpush1.msra.mxu0 0.0
    %152 = vmatprep.subr.mxu0 0.0
    %153 = vmatpush1.msra.mxu0 0.0
    %154 = vmatprep.subr.mxu0 0.0
    %155 = vmatpush1.msra.mxu0 0.0
    %156 = vmatprep.subr.mxu0 0.0
    %157 = vmatpush1.msra.mxu0 0.0
    %158 = vmatprep.subr.mxu0 0.0
    %159 = vmatpush1.msra.mxu0 0.0
    %160 = vmatprep.subr.mxu0 0.0
    %161 = vmatpush1.msra.mxu0 0.0
    %162 = vmatprep.subr.mxu0 0.0
    %163 = vmatpush1.msra.mxu0 0.0
    %164 = vmatprep.subr.mxu0 0.0
    %165 = vmatpush1.msra.mxu0 0.0
    %166 = vmatprep.subr.mxu0 0.0
    %167 = vmatpush1.msra.mxu0 0.0
    %168 = vmatprep.subr.mxu0 0.0
    %169 = vmatpush1.msra.mxu0 0.0
    %170 = vmatprep.subr.mxu0 0.0
    %171 = vmatpush1.msra.mxu0 0.0
    %172 = vmatprep.subr.mxu0 0.0
    %173 = vmatpush1.msra.mxu0 0.0
    %174 = vmatprep.subr.mxu0 0.0
    %175 = vmatpush1.msra.mxu0 0.0
    %176 = vmatprep.subr.mxu0 0.0
    %177 = vmatpush1.msra.mxu0 0.0
    %178 = vmatprep.subr.mxu0 0.0
    %179 = vmatpush1.msra.mxu0 0.0
    %180 = vmatprep.mubr.f32.mxu0 0.0
    %181 = vmatmul.mubr.f32.gmra.mrb[0].mxu0 %v114
    %v182 = vpop.f32.mrb[0].mxu0
    %v183 = vadd.f32 0.0, %v182
    %v184 = vpop.f32.mrb[0].mxu0
    %v185 = vadd.f32 0.0, %v184
    %186 = vdwg.mxu0
    %v187 = vmul.f32 %v183, 0.125
    %v188 = vmul.f32 %v185, 0.125
    %v189 = vlaneseq
    %v190 = vshrl.u32 %v189, 7
    %v191 = vsub.s32 0, %v190
    %v192 = vrot.slane %v187, %v191
    %v193 = vlaneseq
    %v194 = vshrl.u32 %v193, 7
    %v195 = vsub.s32 0, %v194
    %v196 = vrot.slane %v188, %v195
    %v197 = vsub.f32 %v106, %v192
    %v198 = vsub.f32 %v108, %v196
    %v199 = vmul.f32 %v197, %v197
    %v200 = vmul.f32 %v198, %v198
    %201 = vmatprep.subr.mxu0 %v200
    %202 = vmatpush1.msra.mxu0 %v199
    %203 = vmatprep.subr.mxu0 0.0
    %204 = vmatpush1.msra.mxu0 0.0
    %205 = vmatprep.subr.mxu0 0.0
    %206 = vmatpush1.msra.mxu0 0.0
    %207 = vmatprep.subr.mxu0 0.0
    %208 = vmatpush1.msra.mxu0 0.0
    %209 = vmatprep.subr.mxu0 0.0
    %210 = vmatpush1.msra.mxu0 0.0
    %211 = vmatprep.subr.mxu0 0.0
    %212 = vmatpush1.msra.mxu0 0.0
    %213 = vmatprep.subr.mxu0 0.0
    %214 = vmatpush1.msra.mxu0 0.0
    %215 = vmatprep.subr.mxu0 0.0
    %216 = vmatpush1.msra.mxu0 0.0
    %217 = vmatprep.subr.mxu0 0.0
    %218 = vmatpush1.msra.mxu0 0.0
    %219 = vmatprep.subr.mxu0 0.0
    %220 = vmatpush1.msra.mxu0 0.0
    %221 = vmatprep.subr.mxu0 0.0
    %222 = vmatpush1.msra.mxu0 0.0
    %223 = vmatprep.subr.mxu0 0.0
    %224 = vmatpush1.msra.mxu0 0.0
    %225 = vmatprep.subr.mxu0 0.0
    %226 = vmatpush1.msra.mxu0 0.0
    %227 = vmatprep.subr.mxu0 0.0
    %228 = vmatpush1.msra.mxu0 0.0
    %229 = vmatprep.subr.mxu0 0.0
    %230 = vmatpush1.msra.mxu0 0.0
    %231 = vmatprep.subr.mxu0 0.0
    %232 = vmatpush1.msra.mxu0 0.0
    %233 = vmatprep.subr.mxu0 0.0
    %234 = vmatpush1.msra.mxu0 0.0
    %235 = vmatprep.subr.mxu0 0.0
    %236 = vmatpush1.msra.mxu0 0.0
    %237 = vmatprep.subr.mxu0 0.0
    %238 = vmatpush1.msra.mxu0 0.0
    %239 = vmatprep.subr.mxu0 0.0
    %240 = vmatpush1.msra.mxu0 0.0
    %241 = vmatprep.subr.mxu0 0.0
    %242 = vmatpush1.msra.mxu0 0.0
    %243 = vmatprep.subr.mxu0 0.0
    %244 = vmatpush1.msra.mxu0 0.0
    %245 = vmatprep.subr.mxu0 0.0
    %246 = vmatpush1.msra.mxu0 0.0
    %247 = vmatprep.subr.mxu0 0.0
    %248 = vmatpush1.msra.mxu0 0.0
    %249 = vmatprep.subr.mxu0 0.0
    %250 = vmatpush1.msra.mxu0 0.0
    %251 = vmatprep.subr.mxu0 0.0
    %252 = vmatpush1.msra.mxu0 0.0
    %253 = vmatprep.subr.mxu0 0.0
    %254 = vmatpush1.msra.mxu0 0.0
    %255 = vmatprep.subr.mxu0 0.0
    %256 = vmatpush1.msra.mxu0 0.0
    %257 = vmatprep.subr.mxu0 0.0
    %258 = vmatpush1.msra.mxu0 0.0
    %259 = vmatprep.subr.mxu0 0.0
    %260 = vmatpush1.msra.mxu0 0.0
    %261 = vmatprep.subr.mxu0 0.0
    %262 = vmatpush1.msra.mxu0 0.0
    %263 = vmatprep.subr.mxu0 0.0
    %264 = vmatpush1.msra.mxu0 0.0
    %265 = vmatprep.mubr.f32.mxu0 0.0
    %266 = vmatmul.mubr.f32.gmra.mrb[0].mxu0 %v114
    %v267 = vpop.f32.mrb[0].mxu0
    %v268 = vadd.f32 0.0, %v267
    %v269 = vpop.f32.mrb[0].mxu0
    %v270 = vadd.f32 0.0, %v269
    %271 = vdwg.mxu0
    %v272 = vmul.f32 %v268, 0.125
    %v273 = vmul.f32 %v270, 0.125
    %v274 = vld [vmem:[%s2] ss:$2 sm:$0x3]
    %s275 = scalar_lea.vmem %s2, 1
    %v276 = vld [vmem:[%s275] ss:$2 sm:$0x3]
    %v277 = vadd.f32 %v272, 1e-05
    %v278 = vadd.f32 %v273, 1e-05
    %v279 = vrsqrt.pop %v277
    %v280 = vrsqrt.pop %v278
    %v283 = vcombine.low %v279, %v280
    %v285 = vunpack.c.l.s4 1966171168
    %v286 = vunpack.c.0.s8 %v285
    %v287 = vlaneseq
    %v288 = vshrl.u32 %v287, 7
    %v289 = vsub.s32 %v286, %v288
    %v290 = vrot.slane %v283, %v289
    %v292 = vunpack.c.l.s4 1966171168
    %v293 = vunpack.c.0.s8 %v292
    %v294 = vlaneseq
    %v295 = vshrl.u32 %v294, 7
    %v296 = vsub.s32 %v293, %v295
    %v297 = vrot.slane %v290, %v296
    %v299 = vmul.f32 %v274, %v297
    %v301 = vlaneseq
    %v302 = vshrl.u32 %v301, 7
    %v303 = vsub.s32 0, %v302
    %v304 = vrot.slane %v299, %v303
    %v305 = vlaneseq
    %v306 = vshrl.u32 %v305, 7
    %v307 = vsub.s32 1, %v306
    %v308 = vrot.slane %v299, %v307
    %v311 = vmul.f32 %v197, %v304
    %v312 = vmul.f32 %v198, %v308
    %v314 = vlaneseq
    %v315 = vshrl.u32 %v314, 7
    %v316 = vsub.s32 0, %v315
    %v317 = vrot.slane %v276, %v316
    %v318 = vlaneseq
    %v319 = vshrl.u32 %v318, 7
    %v320 = vsub.s32 1, %v319
    %v321 = vrot.slane %v276, %v320
    %v324 = vadd.f32 %v311, %v317
    %v325 = vadd.f32 %v312, %v321
    %v326 = vmul.f32 %v324, 0.2
    %v327 = vmul.f32 %v325, 0.2
    %v328 = vmax.f32 %v324, %v326
    %v329 = vmax.f32 %v325, %v327
    %330 = vst [vmem:[#allocation7] sm:$0xff] %v328
    %331 = vst [vmem:[#allocation7 + $0x8] sm:$0xff] %v329
    // Predicated region
    $region22: #{tpu_custom_call.1} parent=1 // pred_check
      _
    $region23: #{tpu_custom_call.1} parent=1 // pred_check_branch
      %333 = sbr.rel (0) target = $region25
    $region24: #{tpu_custom_call.1} parent=1 // pred_region
      %s335 = ssub.s32 256, 128
      %336 = vsyncadd [#allocation4], %s335
      %s338 = sshll.u32 [#allocation7], 4
      %s339 = int_to_ptr.vmem [resolvable:$true] %s338
      %341 = dma.vmem_to_hbm [thread:$0]  %s339, 128, %s3, [#allocation4]
    $region25: #{tpu_custom_call.1} parent=1 // pred_fallthru
      _
    // Predicated region
    $region26: #{tpu_custom_call.1} parent=1 // pred_check
      _
    $region27: #{tpu_custom_call.1} parent=1 // pred_check_branch
      %343 = sbr.rel (0) target = $region29
    $region28: #{tpu_custom_call.1} parent=1 // pred_region
      %344 = dma.done [#allocation4], 256
    $region29: #{tpu_custom_call.1} parent=1 // pred_fallthru
      _
    %345 = vsyncpa [#allocation3], 1
    %346 = vsyncpa [#allocation6], 1
    %347 = vsyncpa [#allocation4], 1

</llo_original>
